<compile_context>
chip_gen: v5e
topology: v5e:2x2
jax: 0.10.0
libtpu: 0.0.40
codegen_flags: <defaults>
</compile_context>

<pallas_src>
import math

import jax
import jax.numpy as jnp
from jax.experimental import pallas as pl
from jax.experimental.pallas import tpu as pltpu


def _make_kernel(tc, compute_dtype):
    def kernel(x_ref, w_ref, inv_nw_ref, mnx_ref, lbl_ref, o_ref):
        x = x_ref[...]                      # (tb, D)
        w = w_ref[...]                      # (tc, D)
        if compute_dtype is not None and x.dtype != compute_dtype:
            x = x.astype(compute_dtype)
            w = w.astype(compute_dtype)

        # x @ w.T without materializing a transposed weight tile (contract last dims).
        acc = jax.lax.dot_general(
            x, w,
            dimension_numbers=(((1,), (1,)), ((), ())),
            preferred_element_type=jnp.float32,
        )                                   # (tb, tc) f32

        # column-wise scale by 1/max(||w_c||, 1e-12)  ->  x @ w_hat.T
        cosine = acc * inv_nw_ref[...]      # (1, tc) broadcasts over (tb, tc)

        # fused one-hot margin subtraction: subtract m*||x|| at the label column only.
        j = pl.program_id(1)
        class_ids = jax.lax.broadcasted_iota(jnp.int32, acc.shape, 1) + j * tc
        margin = jnp.where(class_ids == lbl_ref[...], mnx_ref[...], jnp.float32(0.0))

        o_ref[...] = (cosine - margin).astype(o_ref.dtype)

    return kernel


def _pick_tile(n, preferred, align):
    """Largest aligned divisor of n that is <= preferred; else full extent."""
    if n <= preferred:
        return n
    t = (preferred // align) * align
    while t >= align:
        if n % t == 0:
            return t
        t -= align
    return n


def margin_cosine_product(x, weight, label, m=0.05, compute_dtype=None,
                          out_dtype=jnp.float32):
    """x: (B, D) f32, weight: (C, D) f32, label: (B,) int -> (B, C) out_dtype."""
    B, D = x.shape
    C, D2 = weight.shape
    assert D == D2

    eps = jnp.float32(1e-12)

    # Tiny per-row / per-class precomputes (B + C floats) done once in the wrapper.
    norm_x = jnp.sqrt(jnp.sum(x.astype(jnp.float32) ** 2, axis=1, keepdims=True))   # (B, 1)
    m_norm_x = (jnp.float32(m) * norm_x).astype(jnp.float32)                        # (B, 1)
    inv_norm_w = jax.lax.rsqrt(
        jnp.maximum(jnp.sum(weight.astype(jnp.float32) ** 2, axis=1), eps * eps)
    ).reshape(1, C).astype(jnp.float32)                                              # (1, C)

    label2d = label.reshape(B, 1).astype(jnp.int32)                                  # (B, 1)

    # Tile sizes: batch tile multiple of 8 (or full), class tile multiple of 128 (or full)
    # so the output block is lane-dense and MXU tiles are full width.
    tb = _pick_tile(B, 128, 8)
    tc = _pick_tile(C, 512, 128)
    grid = (B // tb, C // tc)

    kernel = _make_kernel(tc, compute_dtype)

    return pl.pallas_call(
        kernel,
        out_shape=jax.ShapeDtypeStruct((B, C), out_dtype),
        grid_spec=pltpu.PrefetchScalarGridSpec(
            num_scalar_prefetch=0,
            grid=grid,
            in_specs=[
                pl.BlockSpec((tb, D), lambda i, j: (i, 0)),   # x tile
                pl.BlockSpec((tc, D), lambda i, j: (j, 0)),   # weight tile (class axis)
                pl.BlockSpec((1, tc), lambda i, j: (0, j)),   # 1/||w|| per class
                pl.BlockSpec((tb, 1), lambda i, j: (i, 0)),   # m*||x|| per row
                pl.BlockSpec((tb, 1), lambda i, j: (i, 0)),   # label per row
            ],
            out_specs=pl.BlockSpec((tb, tc), lambda i, j: (i, j)),
        ),
        compiler_params=pltpu.CompilerParams(
            dimension_semantics=("parallel", "parallel"),
        ),
    )(x, weight, inv_norm_w, m_norm_x, label2d)


def _reference(x, weight, label, m=0.05):
    # Pure-JAX reference matching the PyTorch forward exactly.
    norm_x = jnp.linalg.norm(x, axis=1, keepdims=True)
    x_hat = x / jnp.maximum(norm_x, 1e-12)
    w_hat = weight / jnp.maximum(jnp.linalg.norm(weight, axis=1, keepdims=True), 1e-12)
    cosine = x_hat @ w_hat.T
    one_hot = jax.nn.one_hot(label, weight.shape[0], dtype=cosine.dtype)
    return (cosine - one_hot * m) * norm_x


if __name__ == "__main__":
    # Small shapes consistent with the module: batch=8, in_features=32, out_features=16
    B, D, C = 8, 32, 16
    s, m = 8.0, 0.05   # s is stored on the module but unused in forward

    key = jax.random.PRNGKey(0)
    kx, kw, kl = jax.random.split(key, 3)

    x = jax.random.normal(kx, (B, D), dtype=jnp.float32)

    # xavier_uniform_ init: U(-a, a), a = sqrt(6 / (fan_in + fan_out))
    a = math.sqrt(6.0 / (D + C))
    weight = jax.random.uniform(kw, (C, D), minval=-a, maxval=a, dtype=jnp.float32)

    label = jax.random.randint(kl, (B,), 0, C, dtype=jnp.int32)

    # f32 matmul here so the result matches the f32 reference to tight tolerance;
    # pass compute_dtype=jnp.bfloat16 for full-rate MXU on real deployment shapes.
    out = margin_cosine_product(x, weight, label, m=m, compute_dtype=None)
    out = jax.block_until_ready(out)

    ref = _reference(x, weight, label, m=m)
    assert out.shape == (B, C)
    assert jnp.allclose(out, ref, atol=1e-4, rtol=1e-5), float(jnp.max(jnp.abs(out - ref)))

    print("KERNEL_OK")
</pallas_src>

<mosaic_0001>
module attributes {stable_mosaic.version = 11 : i64} {
  func.func @kernel(%arg0: i32, %arg1: i32, %arg2: memref<8x32xf32, #tpu.memory_space<vmem>>, %arg3: memref<16x32xf32, #tpu.memory_space<vmem>>, %arg4: memref<1x16xf32, #tpu.memory_space<vmem>>, %arg5: memref<8x1xf32, #tpu.memory_space<vmem>>, %arg6: memref<8x1xi32, #tpu.memory_space<vmem>>, %arg7: memref<8x16xf32, #tpu.memory_space<vmem>>) attributes {dimension_semantics = [#tpu.dimension_semantics<parallel>, #tpu.dimension_semantics<parallel>], iteration_bounds = array<i64: 1, 1>, scalar_prefetch = 0 : i64, scratch_operands = 0 : i64, tpu.core_type = #tpu.core_type<tc>, window_params = [{transform_indices = @transform_0, window_bounds = array<i64: 8, 32>}, {transform_indices = @transform_1, window_bounds = array<i64: 16, 32>}, {transform_indices = @transform_2, window_bounds = array<i64: 1, 16>}, {transform_indices = @transform_3, window_bounds = array<i64: 8, 1>}, {transform_indices = @transform_4, window_bounds = array<i64: 8, 1>}, {transform_indices = @transform_5, window_bounds = array<i64: 8, 16>}]} {
    %c0 = arith.constant 0 : index
    %c0_0 = arith.constant 0 : index
    %0 = vector.load %arg2[%c0, %c0_0] : memref<8x32xf32, #tpu.memory_space<vmem>>, vector<8x32xf32>
    %c0_1 = arith.constant 0 : index
    %c0_2 = arith.constant 0 : index
    %1 = vector.load %arg3[%c0_1, %c0_2] : memref<16x32xf32, #tpu.memory_space<vmem>>, vector<16x32xf32>
    %cst = arith.constant dense<0.000000e+00> : vector<8x16xf32>
    %2 = tpu.matmul %0, %1, %cst {dimension_numbers = #tpu.dot_dimension_numbers<[1], [1], [0], [0], [0, 0, 1, 0], [], []>} : vector<8x32xf32>, vector<16x32xf32>, vector<8x16xf32> -> vector<8x16xf32>
    %c0_3 = arith.constant 0 : index
    %c0_4 = arith.constant 0 : index
    %3 = vector.load %arg4[%c0_3, %c0_4] : memref<1x16xf32, #tpu.memory_space<vmem>>, vector<1x16xf32>
    %4 = vector.broadcast %3 : vector<1x16xf32> to vector<8x16xf32>
    %5 = arith.mulf %2, %4 : vector<8x16xf32>
    %6 = tpu.iota {dimensions = array<i32: 1>} : vector<8x16xi32>
    %c16_i32 = arith.constant 16 : i32
    %7 = arith.muli %arg1, %c16_i32 : i32
    %8 = vector.broadcast %7 : i32 to vector<8x16xi32>
    %9 = arith.addi %6, %8 : vector<8x16xi32>
    %c0_5 = arith.constant 0 : index
    %c0_6 = arith.constant 0 : index
    %10 = vector.load %arg6[%c0_5, %c0_6] : memref<8x1xi32, #tpu.memory_space<vmem>>, vector<8x1xi32>
    %11 = vector.broadcast %10 : vector<8x1xi32> to vector<8x16xi32>
    %12 = arith.cmpi eq, %9, %11 : vector<8x16xi32>
    %c0_7 = arith.constant 0 : index
    %c0_8 = arith.constant 0 : index
    %13 = vector.load %arg5[%c0_7, %c0_8] : memref<8x1xf32, #tpu.memory_space<vmem>>, vector<8x1xf32>
    %cst_9 = arith.constant 0.000000e+00 : f32
    %14 = vector.shape_cast %13 : vector<8x1xf32> to vector<8x1xf32>
    %15 = vector.broadcast %14 : vector<8x1xf32> to vector<8x16xf32>
    %16 = vector.broadcast %cst_9 : f32 to vector<8x16xf32>
    %17 = arith.select %12, %15, %16 : vector<8x16xi1>, vector<8x16xf32>
    %18 = arith.subf %5, %17 : vector<8x16xf32>
    %c0_10 = arith.constant 0 : index
    %c0_11 = arith.constant 0 : index
    %19 = vector.load %arg7[%c0_10, %c0_11] : memref<8x16xf32, #tpu.memory_space<vmem>>, vector<8x16xf32>
    tpu.vector_store %arg7[%c0_10, %c0_11], %18 {strides = array<i32>} : memref<8x16xf32, #tpu.memory_space<vmem>>, vector<8x16xf32>,
    return
  }
  func.func @transform_0(%arg0: i32, %arg1: i32) -> (i32, i32) {
    %c0_i32 = arith.constant 0 : i32
    %c0_i32_0 = arith.constant 0 : i32
    return %arg0, %c0_i32 : i32, i32
  }
  func.func @transform_1(%arg0: i32, %arg1: i32) -> (i32, i32) {
    %c0_i32 = arith.constant 0 : i32
    %c0_i32_0 = arith.constant 0 : i32
    return %arg1, %c0_i32 : i32, i32
  }
  func.func @transform_2(%arg0: i32, %arg1: i32) -> (i32, i32) {
    %c0_i32 = arith.constant 0 : i32
    %c0_i32_0 = arith.constant 0 : i32
    return %c0_i32, %arg1 : i32, i32
  }
  func.func @transform_3(%arg0: i32, %arg1: i32) -> (i32, i32) {
    %c0_i32 = arith.constant 0 : i32
    %c0_i32_0 = arith.constant 0 : i32
    return %arg0, %c0_i32 : i32, i32
  }
  func.func @transform_4(%arg0: i32, %arg1: i32) -> (i32, i32) {
    %c0_i32 = arith.constant 0 : i32
    %c0_i32_0 = arith.constant 0 : i32
    return %arg0, %c0_i32 : i32, i32
  }
  func.func @transform_5(%arg0: i32, %arg1: i32) -> (i32, i32) {
    %c0_i32 = arith.constant 0 : i32
    return %arg0, %arg1 : i32, i32
  }
}

</mosaic_0001>

<llo_original>
// kernel: tpu_custom_call.1
$region0: #{tpu_custom_call.1}
  #allocation0 [shape = 'u32[]', space=smem, size = 0x4, offset = 0x4, fixed_abs, tag = 'smem constant byte address 0x4 - core index']
  #allocation1 [shape = 'u32[72,128]{1,0:T(1,128)}', space=vmem, size = 0x9000, scoped, tag = 'internal scratch']
  %s0 = inlined_call_operand.hbm [shape: f32[8,32], index: 0, kind: input, shape index: {}]
  %s1 = inlined_call_operand.vmem [shape: f32[16,32], index: 1, kind: input, shape index: {}]
  %s2 = inlined_call_operand.vmem [shape: f32[1,16], index: 2, kind: input, shape index: {}]
  %s3 = inlined_call_operand.vmem [shape: f32[8,1], index: 3, kind: input, shape index: {}]
  %s4 = inlined_call_operand.vmem [shape: s32[8,1], index: 4, kind: input, shape index: {}]
  %s5 = inlined_call_operand.hbm [shape: f32[8,16], index: 5, kind: output, shape index: {}]
  %s6 = sld [smem:[#allocation0]]
  $region34: #{tpu_custom_call.1} parent=0
    _
  %s8 = ssub.s32 1, %s6
  %s9 = scalar_select 0, %s8, %s6
  $region1: #{tpu_custom_call.1} parent=0
    #allocation2 [shape = 'u8[4096]{0}', space=vmem, size = 0x1000, scoped, tag = 'input window, operand 0, single buffered']
    #allocation3 [shape = 's32[1]{0}', space=sflag, size = 0x4, scoped, tag = 'scoped memory for tpu_custom_call.1']
    #allocation4 [shape = 's32[1]{0}', space=sflag, size = 0x4, scoped, tag = 'scoped memory for tpu_custom_call.1']
    #allocation5 [shape = 'u8[4096]{0}', space=vmem, size = 0x1000, scoped, tag = 'output window, operand 0, single buffered']
    %10 = vsyncpa [#allocation3], 0
    %11 = vsyncpa [#allocation4], 0
    // Predicated region
    $region2: #{tpu_custom_call.1} parent=1 // pred_check
      _
    $region3: #{tpu_custom_call.1} parent=1 // pred_check_branch
      %13 = sbr.rel (0) target = $region5
    $region4: #{tpu_custom_call.1} parent=1 // pred_region
      %15 = vsyncadd [#allocation3], 0
      %s17 = sshll.u32 %s0, 4
      %s18 = int_to_ptr.hbm [resolvable:$true] %s17
      %s19 = sshll.u32 [#allocation2], 4
      %s20 = int_to_ptr.vmem [resolvable:$true] %s19
      %22 = dma.hbm_to_vmem [thread:$0]  %s18, 128, %s20, [#allocation3]
    $region5: #{tpu_custom_call.1} parent=1 // pred_fallthru
      _
    // Predicated region
    $region6: #{tpu_custom_call.1} parent=1 // pred_check
      _
    $region7: #{tpu_custom_call.1} parent=1 // pred_check_branch
      %24 = sbr.rel (0) target = $region9
    $region8: #{tpu_custom_call.1} parent=1 // pred_region
      _
    $region9: #{tpu_custom_call.1} parent=1 // pred_fallthru
      _
    // Predicated region
    $region10: #{tpu_custom_call.1} parent=1 // pred_check
      _
    $region11: #{tpu_custom_call.1} parent=1 // pred_check_branch
      %26 = sbr.rel (0) target = $region13
    $region12: #{tpu_custom_call.1} parent=1 // pred_region
      _
    $region13: #{tpu_custom_call.1} parent=1 // pred_fallthru
      _
    // Predicated region
    $region14: #{tpu_custom_call.1} parent=1 // pred_check
      _
    $region15: #{tpu_custom_call.1} parent=1 // pred_check_branch
      %28 = sbr.rel (0) target = $region17
    $region16: #{tpu_custom_call.1} parent=1 // pred_region
      _
    $region17: #{tpu_custom_call.1} parent=1 // pred_fallthru
      _
    // Predicated region
    $region18: #{tpu_custom_call.1} parent=1 // pred_check
      _
    $region19: #{tpu_custom_call.1} parent=1 // pred_check_branch
      %30 = sbr.rel (0) target = $region21
    $region20: #{tpu_custom_call.1} parent=1 // pred_region
      _
    $region21: #{tpu_custom_call.1} parent=1 // pred_fallthru
      _
    // Predicated region
    $region22: #{tpu_custom_call.1} parent=1 // pred_check
      _
    $region23: #{tpu_custom_call.1} parent=1 // pred_check_branch
      %32 = sbr.rel (0) target = $region25
    $region24: #{tpu_custom_call.1} parent=1 // pred_region
      %34 = dma.done [#allocation3], 128
    $region25: #{tpu_custom_call.1} parent=1 // pred_fallthru
      _
    %v35 = vld [vmem:[#allocation2] sm:$0xff]
    %v36 = vld [vmem:[%s1] sm:$0xff]
    %v37 = vld [vmem:[%s1 + $0x8] sm:$0xff]
    %vm38 = vcmask 261120
    %v40 = vsel %vm38, %v35, 0
    %v43 = vsel %vm38, %v36, 0
    %v46 = vsel %vm38, %v37, 0
    %48 = vmatpush.xpose.msra.mxu0 0.0
    %49 = vmatpush.xpose.msra.mxu0 0.0
    %50 = vmatpush.xpose.msra.mxu0 0.0
    %51 = vmatpush.xpose.msra.mxu0 0.0
    %52 = vmatpush.xpose.msra.mxu0 0.0
    %53 = vmatpush.xpose.msra.mxu0 0.0
    %54 = vmatpush.xpose.msra.mxu0 0.0
    %55 = vmatpush.xpose.msra.mxu0 0.0
    %56 = vmatpush.xpose.msra.mxu0 0.0
    %57 = vmatpush.xpose.msra.mxu0 0.0
    %58 = vmatpush.xpose.msra.mxu0 0.0
    %59 = vmatpush.xpose.msra.mxu0 0.0
    %60 = vmatpush.xpose.msra.mxu0 0.0
    %61 = vmatpush.xpose.msra.mxu0 0.0
    %62 = vmatpush.xpose.msra.mxu0 %v46
    %63 = vmatpush.xpose.msra.mxu0 %v43
    %64 = vmatmul.f32.gmra.mxu0 %v40
    %v65 = vpop.f32.mrf.mxu0
    %v66 = vadd.f32 0.0, %v65
    %67 = vdwg.mxu0
    %v68 = vld [vmem:[%s2] sm:$0x1]
    %v70 = vperm.slane %v68, 0
    %v72 = vmul.f32 %v66, %v70
    %v73 = vlaneseq
    %v74 = vand.u32 %v73, 127
    %s75 = smul.u32 0, 16
    %v76 = vstv %s75
    %v77 = vadd.s32 %v74, %v76
    %v78 = vld [vmem:[%s4] sm:$0xff]
    %79 = vset.pattern.permute.xlu0 0
    %80 = vperm.xlu0 %79, %v78
    %v81 = vpop.permute.xlu0 %80
    %vm82 = vcmp.eq.s32.totalorder %v77, %v81
    %v83 = vld [vmem:[%s3] sm:$0xff]
    %85 = vset.pattern.permute.xlu0 0
    %86 = vperm.xlu0 %85, %v83
    %v87 = vpop.permute.xlu0 %86
    %v89 = vsel %vm82, %v87, 0.0
    %v90 = vsub.f32 %v72, %v89
    %vm91 = vcmask 130048
    %92 = vst.msk [vmem:[#allocation5] sm:$0xff] %vm91, %v90
    // Predicated region
    $region26: #{tpu_custom_call.1} parent=1 // pred_check
      _
    $region27: #{tpu_custom_call.1} parent=1 // pred_check_branch
      %94 = sbr.rel (0) target = $region29
    $region28: #{tpu_custom_call.1} parent=1 // pred_region
      %96 = vsyncadd [#allocation4], 0
      %s98 = sshll.u32 [#allocation5], 4
      %s99 = int_to_ptr.vmem [resolvable:$true] %s98
      %s100 = sshll.u32 %s5, 4
      %s101 = int_to_ptr.hbm [resolvable:$true] %s100
      %103 = dma.vmem_to_hbm [thread:$0]  %s99, 128, %s101, [#allocation4]
    $region29: #{tpu_custom_call.1} parent=1 // pred_fallthru
      _
    // Predicated region
    $region30: #{tpu_custom_call.1} parent=1 // pred_check
      _
    $region31: #{tpu_custom_call.1} parent=1 // pred_check_branch
      %105 = sbr.rel (0) target = $region33
    $region32: #{tpu_custom_call.1} parent=1 // pred_region
      %107 = dma.done [#allocation4], 128
    $region33: #{tpu_custom_call.1} parent=1 // pred_fallthru
      _
    %108 = vsyncpa [#allocation3], 1
    %109 = vsyncpa [#allocation4], 1

</llo_original>
